<compile_context>
chip_gen: v7x
topology: tpu7x:2x2x1
jax: 0.10.0
libtpu: 0.0.40
codegen_flags: <defaults>
</compile_context>

<pallas_src>
import math
import functools

import jax
import jax.numpy as jnp
from jax.experimental import pallas as pl
from jax.experimental.pallas import tpu as pltpu


# ----------------------------- Pallas kernel ------------------------------ #

def _cont_kernel(x_ref, wav_ref, bav_ref, wproj_ref, bproj_ref, bd_ref, o_ref):
    D = x_ref.shape[-1]
    x = x_ref[...].astype(jnp.float32)                        # [tm, D]

    # fused projection: columns [0:D) give a = (q - k) * scale, [D:2D) give v
    av = jnp.dot(x.astype(wav_ref.dtype), wav_ref[...],
                 preferred_element_type=jnp.float32)
    av = av + bav_ref[...].astype(jnp.float32)                # [tm, 2D]
    a = av[:, 0:D]
    v = av[:, D:2 * D]

    # per-head softmax over head_dim, fully vectorized:
    #   full-row max is a valid stabilizer (>= every head-segment max);
    #   per-head sums via one MXU matmul with a block-diagonal ones matrix.
    a = a - jnp.max(a, axis=-1, keepdims=True)
    e = jnp.exp(a)                                            # [tm, D]  (EUP)
    denom = jnp.dot(e, bd_ref[...],
                    preferred_element_type=jnp.float32)       # [tm, D] head sums
    # approx=True would move the divide to the EUP vrcp slot; kept exact to
    # stay comfortably inside the 1e-4 comparison tolerance.
    attn = e * pl.reciprocal(denom, approx=False)
    out = attn * v                                            # [tm, D]

    # output projection + residual
    res = jnp.dot(out.astype(wproj_ref.dtype), wproj_ref[...],
                  preferred_element_type=jnp.float32)
    res = res + bproj_ref[...].astype(jnp.float32)
    o_ref[...] = (x + res).astype(o_ref.dtype)


def cont_forward(x, wqkv, bqkv, wproj, bproj, *, num_heads, local_size,
                 qk_scale=None, tm=256, weights_dtype=None):
    """ConT forward.  x: [B, S, D] -> [B, S, D].

    wqkv: [D, 3D], bqkv: [3D], wproj: [D, D], bproj: [D]
    (weights stored [in, out], i.e. transposed vs. nn.Linear.weight).
    """
    B, S, D = x.shape
    H = num_heads
    assert D % H == 0
    d = D // H
    nl = S // local_size
    # the original module requires nl to be a power of two (log2 splits)
    assert nl >= 1 and (nl & (nl - 1)) == 0
    scale = qk_scale if qk_scale is not None else d ** (-0.5)

    # ---- host-side prep (all foldable constants computed outside kernel) --
    wq, wk, wv = wqkv[:, 0:D], wqkv[:, D:2 * D], wqkv[:, 2 * D:3 * D]
    bq, bk, bv = bqkv[0:D], bqkv[D:2 * D], bqkv[2 * D:3 * D]
    w_av = jnp.concatenate([(wq - wk) * scale, wv], axis=1)           # [D, 2D]
    b_av = jnp.concatenate([(bq - bk) * scale, bv]).reshape(1, 2 * D)
    w_pj = wproj                                                      # [D, D]
    b_pj = bproj.reshape(1, D)
    if weights_dtype is not None:
        w_av = w_av.astype(weights_dtype)
        w_pj = w_pj.astype(weights_dtype)

    # block-diagonal ones matrix: e @ bd yields per-head sums broadcast across
    # each head's lanes (segmented reduction on the otherwise-idle MXU slot).
    head_id = jnp.arange(D) // d
    bd = (head_id[:, None] == head_id[None, :]).astype(jnp.float32)   # [D, D]

    # ---- row tiling -------------------------------------------------------
    M = B * S
    tm_eff = min(int(tm), M)
    if tm_eff < M:
        tm_eff = max(8, (tm_eff // 8) * 8)          # sublane alignment
    Mp = ((M + tm_eff - 1) // tm_eff) * tm_eff
    xf = x.reshape(M, D)
    if Mp != M:
        xf = jnp.pad(xf, ((0, Mp - M), (0, 0)))

    # VMEM budget: double-buffered x/out tiles + resident weights, with
    # headroom, capped below the v7x 64 MiB physical ceiling.
    wbytes = (w_av.size * w_av.dtype.itemsize
              + w_pj.size * w_pj.dtype.itemsize
              + bd.size * 4 + b_av.size * 4 + b_pj.size * 4)
    tbytes = 2 * 2 * tm_eff * D * x.dtype.itemsize
    vmem_limit = int(min(max(2 * (wbytes + tbytes) + (8 << 20), 32 << 20),
                         60 << 20))

    flops = 2 * Mp * D * (2 * D) + 2 * Mp * D * D + 2 * Mp * D * D
    bytes_accessed = 2 * Mp * D * x.dtype.itemsize + wbytes
    cost = pl.CostEstimate(flops=flops, transcendentals=Mp * D,
                           bytes_accessed=bytes_accessed)

    out = pl.pallas_call(
        _cont_kernel,
        out_shape=jax.ShapeDtypeStruct((Mp, D), x.dtype),
        grid=(Mp // tm_eff,),
        in_specs=[
            pl.BlockSpec((tm_eff, D), lambda i: (i, 0)),      # x tile
            pl.BlockSpec((D, 2 * D), lambda i: (0, 0)),       # W_av (resident)
            pl.BlockSpec((1, 2 * D), lambda i: (0, 0)),       # b_av
            pl.BlockSpec((D, D), lambda i: (0, 0)),           # W_proj
            pl.BlockSpec((1, D), lambda i: (0, 0)),           # b_proj
            pl.BlockSpec((D, D), lambda i: (0, 0)),           # block-diag ones
        ],
        out_specs=pl.BlockSpec((tm_eff, D), lambda i: (i, 0)),
        input_output_aliases={0: 0},                          # reuse x buffer
        cost_estimate=cost,
        compiler_params=pltpu.CompilerParams(
            dimension_semantics=("parallel",),                # rows independent
            vmem_limit_bytes=vmem_limit),
    )(xf, w_av, b_av, w_pj, b_pj, bd)

    if Mp != M:
        out = out[:M]
    return out.reshape(B, S, D)


# ----------------- pure-JAX reference (full original algorithm) ------------ #

def cont_reference(x, wqkv, bqkv, wproj, bproj, *, num_heads, local_size,
                   qk_scale=None):
    B, S, D = x.shape
    H = num_heads
    d = D // H
    nl = S // local_size
    scale = qk_scale if qk_scale is not None else d ** (-0.5)

    qkv = x @ wqkv + bqkv                                       # [B,S,3D]
    qkv = qkv.reshape(B, S, 3, H, d).transpose(2, 0, 3, 1, 4)   # [3,B,H,S,d]

    q_pre = qkv[0].reshape(B * H, S, d).transpose(0, 2, 1)      # [BH,d,S]
    ntimes = int(math.log2(nl))
    q_idx_last = jnp.broadcast_to(jnp.arange(S)[None, :], (B * H, S))
    eps = 1e-12
    for _ in range(ntimes):
        bh, dd, n = q_pre.shape
        q_avg = q_pre.reshape(bh, dd, 2, n // 2).mean(axis=-1)  # [bh,d,2]
        q_avg = q_avg.transpose(0, 2, 1)                        # [bh,2,d]
        q_avg = q_avg / (jnp.linalg.norm(q_avg, axis=-1, keepdims=True) + eps)
        q_norm = q_pre.transpose(0, 2, 1)                       # [bh,n,d]
        q_norm = q_norm / (jnp.linalg.norm(q_norm, axis=-1, keepdims=True) + eps)
        q_scores = jnp.sum((q_norm[:, :, None, :] - q_avg[:, None, :, :]) ** 2,
                           axis=-1)                             # [bh,n,2]
        q_ratio = (q_scores[:, :, 0] + 1.0) / (q_scores[:, :, 1] + 1.0)
        q_idx = jnp.argsort(q_ratio, axis=-1)                   # [bh,n]
        q_idx_last = jnp.take_along_axis(q_idx_last, q_idx,
                                         axis=-1).reshape(bh * 2, n // 2)
        gidx = jnp.broadcast_to(q_idx[:, None, :], q_pre.shape)
        q_pre = jnp.take_along_axis(q_pre, gidx, axis=-1)
        q_pre = q_pre.reshape(bh, dd, 2, n // 2).transpose(0, 2, 1, 3)
        q_pre = q_pre.reshape(bh * 2, dd, n // 2)

    q_idx = q_idx_last.reshape(B, H, S)
    q_idx_rev = jnp.argsort(q_idx, axis=-1)

    gidx = jnp.broadcast_to(q_idx[None, :, :, :, None], qkv.shape)
    qkv_pre = jnp.take_along_axis(qkv, gidx, axis=3)            # [3,B,H,S,d]
    q, k, v = qkv_pre[0], qkv_pre[1], qkv_pre[2]                # [B,H,S,d]

    attn = jax.nn.softmax((q - k) * scale, axis=-1)
    out = attn * v                                              # [B,H,S,d]
    out = out.transpose(0, 1, 3, 2)                             # [B,H,d,S]
    ridx = jnp.broadcast_to(q_idx_rev[:, :, None, :], out.shape)
    res = jnp.take_along_axis(out, ridx, axis=-1)               # [B,H,d,S]
    res = res.reshape(B, D, S).transpose(0, 2, 1)               # [B,S,D]
    res = res @ wproj + bproj
    return x + res


# --------------------------------- main ------------------------------------ #

if __name__ == "__main__":
    B, S, D, H, LS = 2, 64, 32, 4, 16   # nl = S // LS = 4 (power of two)

    key = jax.random.PRNGKey(0)
    kx, k1, k2, k3, k4 = jax.random.split(key, 5)
    x = jax.random.normal(kx, (B, S, D), dtype=jnp.float32)
    wqkv = 0.1 * jax.random.normal(k1, (D, 3 * D), dtype=jnp.float32)
    bqkv = 0.1 * jax.random.normal(k2, (3 * D,), dtype=jnp.float32)
    wproj = 0.1 * jax.random.normal(k3, (D, D), dtype=jnp.float32)
    bproj = 0.1 * jax.random.normal(k4, (D,), dtype=jnp.float32)

    fwd = jax.jit(functools.partial(cont_forward, num_heads=H, local_size=LS))
    y = jax.block_until_ready(fwd(x, wqkv, bqkv, wproj, bproj))

    y_ref = cont_reference(x, wqkv, bqkv, wproj, bproj,
                           num_heads=H, local_size=LS)
    assert y.shape == (B, S, D)
    err = float(jnp.max(jnp.abs(y - y_ref)))
    assert jnp.allclose(y, y_ref, atol=1e-4, rtol=1e-4), err

    print("KERNEL_OK")
</pallas_src>

<mosaic_0001>
module attributes {stable_mosaic.version = 11 : i64} {
  func.func @_cont_kernel(%arg0: i32, %arg1: memref<128x32xf32, #tpu.memory_space<vmem>>, %arg2: memref<32x64xf32, #tpu.memory_space<vmem>>, %arg3: memref<1x64xf32, #tpu.memory_space<vmem>>, %arg4: memref<32x32xf32, #tpu.memory_space<vmem>>, %arg5: memref<1x32xf32, #tpu.memory_space<vmem>>, %arg6: memref<32x32xf32, #tpu.memory_space<vmem>>, %arg7: memref<128x32xf32, #tpu.memory_space<vmem>>) attributes {dimension_semantics = [#tpu.dimension_semantics<parallel>], iteration_bounds = array<i64: 1>, scalar_prefetch = 0 : i64, scratch_operands = 0 : i64, tpu.core_type = #tpu.core_type<tc>, window_params = [{transform_indices = @transform_0, window_bounds = array<i64: 128, 32>}, {pipeline_mode = #tpu.pipeline_mode<synchronous>, transform_indices = @transform_1, window_bounds = array<i64: 32, 64>}, {pipeline_mode = #tpu.pipeline_mode<synchronous>, transform_indices = @transform_2, window_bounds = array<i64: 1, 64>}, {pipeline_mode = #tpu.pipeline_mode<synchronous>, transform_indices = @transform_3, window_bounds = array<i64: 32, 32>}, {pipeline_mode = #tpu.pipeline_mode<synchronous>, transform_indices = @transform_4, window_bounds = array<i64: 1, 32>}, {pipeline_mode = #tpu.pipeline_mode<synchronous>, transform_indices = @transform_5, window_bounds = array<i64: 32, 32>}, {transform_indices = @transform_6, window_bounds = array<i64: 128, 32>}]} {
    %c0 = arith.constant 0 : index
    %c0_0 = arith.constant 0 : index
    %0 = vector.load %arg1[%c0, %c0_0] : memref<128x32xf32, #tpu.memory_space<vmem>>, vector<128x32xf32>
    %c0_1 = arith.constant 0 : index
    %c0_2 = arith.constant 0 : index
    %1 = vector.load %arg2[%c0_1, %c0_2] : memref<32x64xf32, #tpu.memory_space<vmem>>, vector<32x64xf32>
    %cst = arith.constant dense<0.000000e+00> : vector<128x64xf32>
    %2 = tpu.matmul %0, %1, %cst {dimension_numbers = #tpu.dot_dimension_numbers<[1], [0], [0], [1], [0, 0, 1, 1], [], []>} : vector<128x32xf32>, vector<32x64xf32>, vector<128x64xf32> -> vector<128x64xf32>
    %c0_3 = arith.constant 0 : index
    %c0_4 = arith.constant 0 : index
    %3 = vector.load %arg3[%c0_3, %c0_4] : memref<1x64xf32, #tpu.memory_space<vmem>>, vector<1x64xf32>
    %4 = vector.broadcast %3 : vector<1x64xf32> to vector<128x64xf32>
    %5 = arith.addf %2, %4 : vector<128x64xf32>
    %6 = vector.extract_strided_slice %5 {offsets = [0, 0], sizes = [128, 32], strides = [1, 1]} : vector<128x64xf32> to vector<128x32xf32>
    %7 = vector.extract_strided_slice %5 {offsets = [0, 32], sizes = [128, 32], strides = [1, 1]} : vector<128x64xf32> to vector<128x32xf32>
    %cst_5 = arith.constant dense<0xFF800000> : vector<128xf32>
    %8 = vector.multi_reduction <maximumf>, %6, %cst_5 [1] : vector<128x32xf32> to vector<128xf32>
    %9 = vector.shape_cast %8 : vector<128xf32> to vector<128x1xf32>
    %10 = vector.broadcast %9 : vector<128x1xf32> to vector<128x32xf32>
    %11 = arith.subf %6, %10 : vector<128x32xf32>
    %12 = math.exp %11 : vector<128x32xf32>
    %c0_6 = arith.constant 0 : index
    %c0_7 = arith.constant 0 : index
    %13 = vector.load %arg6[%c0_6, %c0_7] : memref<32x32xf32, #tpu.memory_space<vmem>>, vector<32x32xf32>
    %cst_8 = arith.constant dense<0.000000e+00> : vector<128x32xf32>
    %14 = tpu.matmul %12, %13, %cst_8 {dimension_numbers = #tpu.dot_dimension_numbers<[1], [0], [0], [1], [0, 0, 1, 1], [], []>} : vector<128x32xf32>, vector<32x32xf32>, vector<128x32xf32> -> vector<128x32xf32>
    %15 = tpu.reciprocal %14 : vector<128x32xf32> -> vector<128x32xf32>
    %16 = arith.mulf %12, %15 : vector<128x32xf32>
    %17 = arith.mulf %16, %7 : vector<128x32xf32>
    %c0_9 = arith.constant 0 : index
    %c0_10 = arith.constant 0 : index
    %18 = vector.load %arg4[%c0_9, %c0_10] : memref<32x32xf32, #tpu.memory_space<vmem>>, vector<32x32xf32>
    %cst_11 = arith.constant dense<0.000000e+00> : vector<128x32xf32>
    %19 = tpu.matmul %17, %18, %cst_11 {dimension_numbers = #tpu.dot_dimension_numbers<[1], [0], [0], [1], [0, 0, 1, 1], [], []>} : vector<128x32xf32>, vector<32x32xf32>, vector<128x32xf32> -> vector<128x32xf32>
    %c0_12 = arith.constant 0 : index
    %c0_13 = arith.constant 0 : index
    %20 = vector.load %arg5[%c0_12, %c0_13] : memref<1x32xf32, #tpu.memory_space<vmem>>, vector<1x32xf32>
    %21 = vector.broadcast %20 : vector<1x32xf32> to vector<128x32xf32>
    %22 = arith.addf %19, %21 : vector<128x32xf32>
    %23 = arith.addf %0, %22 : vector<128x32xf32>
    %c0_14 = arith.constant 0 : index
    %c0_15 = arith.constant 0 : index
    %24 = vector.load %arg7[%c0_14, %c0_15] : memref<128x32xf32, #tpu.memory_space<vmem>>, vector<128x32xf32>
    tpu.vector_store %arg7[%c0_14, %c0_15], %23 {strides = array<i32>} : memref<128x32xf32, #tpu.memory_space<vmem>>, vector<128x32xf32>,
    return
  }
  func.func @transform_0(%arg0: i32) -> (i32, i32) {
    %c0_i32 = arith.constant 0 : i32
    %c0_i32_0 = arith.constant 0 : i32
    return %arg0, %c0_i32 : i32, i32
  }
  func.func @transform_1(%arg0: i32) -> (i32, i32) {
    %c0_i32 = arith.constant 0 : i32
    %c0_i32_0 = arith.constant 0 : i32
    %c0_i32_1 = arith.constant 0 : i32
    return %c0_i32, %c0_i32_0 : i32, i32
  }
  func.func @transform_2(%arg0: i32) -> (i32, i32) {
    %c0_i32 = arith.constant 0 : i32
    %c0_i32_0 = arith.constant 0 : i32
    %c0_i32_1 = arith.constant 0 : i32
    return %c0_i32, %c0_i32_0 : i32, i32
  }
  func.func @transform_3(%arg0: i32) -> (i32, i32) {
    %c0_i32 = arith.constant 0 : i32
    %c0_i32_0 = arith.constant 0 : i32
    %c0_i32_1 = arith.constant 0 : i32
    return %c0_i32, %c0_i32_0 : i32, i32
  }
  func.func @transform_4(%arg0: i32) -> (i32, i32) {
    %c0_i32 = arith.constant 0 : i32
    %c0_i32_0 = arith.constant 0 : i32
    %c0_i32_1 = arith.constant 0 : i32
    return %c0_i32, %c0_i32_0 : i32, i32
  }
  func.func @transform_5(%arg0: i32) -> (i32, i32) {
    %c0_i32 = arith.constant 0 : i32
    %c0_i32_0 = arith.constant 0 : i32
    %c0_i32_1 = arith.constant 0 : i32
    return %c0_i32, %c0_i32_0 : i32, i32
  }
  func.func @transform_6(%arg0: i32) -> (i32, i32) {
    %c0_i32 = arith.constant 0 : i32
    %c0_i32_0 = arith.constant 0 : i32
    return %arg0, %c0_i32 : i32, i32
  }
}

</mosaic_0001>

<llo_original>
// kernel: cont_forward.1
$region0: #{cont_forward.1}
  #allocation0 [shape = 'u32[]', space=smem, size = 0x4, offset = 0x4, fixed_abs, tag = 'smem constant byte address 0x4 - core index']
  #allocation1 [shape = 'u32[144,128]{1,0:T(1,128)}', space=vmem, size = 0x12000, scoped, tag = 'internal scratch']
  %s0 = inlined_call_operand.vmem [shape: f32[128,32], index: 0, kind: input, shape index: {}, may-alias: {0,6}]
  %s1 = inlined_call_operand.vmem [shape: f32[32,64], index: 1, kind: input, shape index: {}]
  %s2 = inlined_call_operand.vmem [shape: f32[1,64], index: 2, kind: input, shape index: {}]
  %s3 = inlined_call_operand.vmem [shape: f32[32,32], index: 3, kind: input, shape index: {}]
  %s4 = inlined_call_operand.vmem [shape: f32[1,32], index: 4, kind: input, shape index: {}]
  %s5 = inlined_call_operand.vmem [shape: f32[32,32], index: 5, kind: input, shape index: {}]
  %s6 = inlined_call_operand.vmem [shape: f32[128,32], index: 6, kind: output, shape index: {}, may-alias: {0,6}]
  %s7 = sld [smem:[#allocation0]]
  $region34: #{cont_forward.1} parent=0
    _
  %s9 = ssub.s32 1, %s7
  %s10 = scalar_select 0, %s9, %s7
  // Predicated region
  $region2: #{cont_forward.1} parent=0 // pred_check
    _
  $region3: #{cont_forward.1} parent=0 // pred_check_branch
    %12 = sbr.rel (0) target = $region5
  $region4: #{cont_forward.1} parent=0 // pred_region
    _
  $region5: #{cont_forward.1} parent=0 // pred_fallthru
    _
  // Predicated region
  $region6: #{cont_forward.1} parent=0 // pred_check
    _
  $region7: #{cont_forward.1} parent=0 // pred_check_branch
    %14 = sbr.rel (0) target = $region9
  $region8: #{cont_forward.1} parent=0 // pred_region
    _
  $region9: #{cont_forward.1} parent=0 // pred_fallthru
    _
  // Predicated region
  $region10: #{cont_forward.1} parent=0 // pred_check
    _
  $region11: #{cont_forward.1} parent=0 // pred_check_branch
    %16 = sbr.rel (0) target = $region13
  $region12: #{cont_forward.1} parent=0 // pred_region
    _
  $region13: #{cont_forward.1} parent=0 // pred_fallthru
    _
  // Predicated region
  $region14: #{cont_forward.1} parent=0 // pred_check
    _
  $region15: #{cont_forward.1} parent=0 // pred_check_branch
    %18 = sbr.rel (0) target = $region17
  $region16: #{cont_forward.1} parent=0 // pred_region
    _
  $region17: #{cont_forward.1} parent=0 // pred_fallthru
    _
  // Predicated region
  $region18: #{cont_forward.1} parent=0 // pred_check
    _
  $region19: #{cont_forward.1} parent=0 // pred_check_branch
    %20 = sbr.rel (0) target = $region21
  $region20: #{cont_forward.1} parent=0 // pred_region
    _
  $region21: #{cont_forward.1} parent=0 // pred_fallthru
    _
  // Predicated region
  $region22: #{cont_forward.1} parent=0 // pred_check
    _
  $region23: #{cont_forward.1} parent=0 // pred_check_branch
    %22 = sbr.rel (0) target = $region25
  $region24: #{cont_forward.1} parent=0 // pred_region
    _
  $region25: #{cont_forward.1} parent=0 // pred_fallthru
    _
  %v23 = vld [vmem:[%s0] sm:$0xff]
  %v24 = vld [vmem:[%s0 + $0x8] sm:$0xff]
  %v25 = vld [vmem:[%s0 + $0x10] sm:$0xff]
  %v26 = vld [vmem:[%s0 + $0x18] sm:$0xff]
  %v27 = vld [vmem:[%s0 + $0x20] sm:$0xff]
  %v28 = vld [vmem:[%s0 + $0x28] sm:$0xff]
  %v29 = vld [vmem:[%s0 + $0x30] sm:$0xff]
  %v30 = vld [vmem:[%s0 + $0x38] sm:$0xff]
  %v31 = vld [vmem:[%s0 + $0x40] sm:$0xff]
  %v32 = vld [vmem:[%s0 + $0x48] sm:$0xff]
  %v33 = vld [vmem:[%s0 + $0x50] sm:$0xff]
  %v34 = vld [vmem:[%s0 + $0x58] sm:$0xff]
  %v35 = vld [vmem:[%s0 + $0x60] sm:$0xff]
  %v36 = vld [vmem:[%s0 + $0x68] sm:$0xff]
  %v37 = vld [vmem:[%s0 + $0x70] sm:$0xff]
  %v38 = vld [vmem:[%s0 + $0x78] sm:$0xff]
  %v39 = vld [vmem:[%s1] sm:$0xff]
  %v40 = vld [vmem:[%s1 + $0x8] sm:$0xff]
  %v41 = vld [vmem:[%s1 + $0x10] sm:$0xff]
  %v42 = vld [vmem:[%s1 + $0x18] sm:$0xff]
  %v43 = vld [vmem:[%s2] sm:$0x1]
  %v45 = vlaneseq
  %v46 = vshrl.u32 %v45, 7
  %v47 = vsub.s32 0, %v46
  %v48 = vrot.slane %v43, %v47
  %vm50 = vcmask 261120
  %v52 = vsel %vm50, %v23, 0
  %v55 = vsel %vm50, %v24, 0
  %v58 = vsel %vm50, %v25, 0
  %v61 = vsel %vm50, %v26, 0
  %v64 = vsel %vm50, %v27, 0
  %v67 = vsel %vm50, %v28, 0
  %v70 = vsel %vm50, %v29, 0
  %v73 = vsel %vm50, %v30, 0
  %v76 = vsel %vm50, %v31, 0
  %v79 = vsel %vm50, %v32, 0
  %v82 = vsel %vm50, %v33, 0
  %v85 = vsel %vm50, %v34, 0
  %v88 = vsel %vm50, %v35, 0
  %v91 = vsel %vm50, %v36, 0
  %v94 = vsel %vm50, %v37, 0
  %v97 = vsel %vm50, %v38, 0
  %99 = vmatprep.subr.mxu0 0.0
  %100 = vmatpush1.msra.mxu0 %v39
  %101 = vmatprep.subr.mxu0 0.0
  %102 = vmatpush1.msra.mxu0 %v40
  %103 = vmatprep.subr.mxu0 0.0
  %104 = vmatpush1.msra.mxu0 %v41
  %105 = vmatprep.subr.mxu0 0.0
  %106 = vmatpush1.msra.mxu0 %v42
  %107 = vmatprep.subr.mxu0 0.0
  %108 = vmatpush1.msra.mxu0 0.0
  %109 = vmatprep.subr.mxu0 0.0
  %110 = vmatpush1.msra.mxu0 0.0
  %111 = vmatprep.subr.mxu0 0.0
  %112 = vmatpush1.msra.mxu0 0.0
  %113 = vmatprep.subr.mxu0 0.0
  %114 = vmatpush1.msra.mxu0 0.0
  %115 = vmatprep.subr.mxu0 0.0
  %116 = vmatpush1.msra.mxu0 0.0
  %117 = vmatprep.subr.mxu0 0.0
  %118 = vmatpush1.msra.mxu0 0.0
  %119 = vmatprep.subr.mxu0 0.0
  %120 = vmatpush1.msra.mxu0 0.0
  %121 = vmatprep.subr.mxu0 0.0
  %122 = vmatpush1.msra.mxu0 0.0
  %123 = vmatprep.subr.mxu0 0.0
  %124 = vmatpush1.msra.mxu0 0.0
  %125 = vmatprep.subr.mxu0 0.0
  %126 = vmatpush1.msra.mxu0 0.0
  %127 = vmatprep.subr.mxu0 0.0
  %128 = vmatpush1.msra.mxu0 0.0
  %129 = vmatprep.subr.mxu0 0.0
  %130 = vmatpush1.msra.mxu0 0.0
  %131 = vmatprep.subr.mxu0 0.0
  %132 = vmatpush1.msra.mxu0 0.0
  %133 = vmatprep.subr.mxu0 0.0
  %134 = vmatpush1.msra.mxu0 0.0
  %135 = vmatprep.subr.mxu0 0.0
  %136 = vmatpush1.msra.mxu0 0.0
  %137 = vmatprep.subr.mxu0 0.0
  %138 = vmatpush1.msra.mxu0 0.0
  %139 = vmatprep.subr.mxu0 0.0
  %140 = vmatpush1.msra.mxu0 0.0
  %141 = vmatprep.subr.mxu0 0.0
  %142 = vmatpush1.msra.mxu0 0.0
  %143 = vmatprep.subr.mxu0 0.0
  %144 = vmatpush1.msra.mxu0 0.0
  %145 = vmatprep.subr.mxu0 0.0
  %146 = vmatpush1.msra.mxu0 0.0
  %147 = vmatprep.subr.mxu0 0.0
  %148 = vmatpush1.msra.mxu0 0.0
  %149 = vmatprep.subr.mxu0 0.0
  %150 = vmatpush1.msra.mxu0 0.0
  %151 = vmatprep.subr.mxu0 0.0
  %152 = vmatpush1.msra.mxu0 0.0
  %153 = vmatprep.subr.mxu0 0.0
  %154 = vmatpush1.msra.mxu0 0.0
  %155 = vmatprep.subr.mxu0 0.0
  %156 = vmatpush1.msra.mxu0 0.0
  %157 = vmatprep.subr.mxu0 0.0
  %158 = vmatpush1.msra.mxu0 0.0
  %159 = vmatprep.subr.mxu0 0.0
  %160 = vmatpush1.msra.mxu0 0.0
  %161 = vmatprep.subr.mxu0 0.0
  %162 = vmatpush1.msra.mxu0 0.0
  %163 = vmatprep.mubr.f32.mxu0 0.0
  %164 = vmatmul.mubr.f32.gmra.mrb[0].mxu0 %v52
  %v165 = vpop.f32.mrb[0].mxu0
  %v166 = vadd.f32 %v48, %v165
  %v167 = vpop.f32.mrb[0].mxu0
  %168 = vmatprep.mubr.f32.mxu0 0.0
  %169 = vmatmul.mubr.f32.gmra.mrb[0].mxu0 %v55
  %v170 = vpop.f32.mrb[0].mxu0
  %v171 = vadd.f32 %v48, %v170
  %v172 = vpop.f32.mrb[0].mxu0
  %173 = vmatprep.mubr.f32.mxu0 0.0
  %174 = vmatmul.mubr.f32.gmra.mrb[0].mxu0 %v58
  %v175 = vpop.f32.mrb[0].mxu0
  %v176 = vadd.f32 %v48, %v175
  %v177 = vpop.f32.mrb[0].mxu0
  %178 = vmatprep.mubr.f32.mxu0 0.0
  %179 = vmatmul.mubr.f32.gmra.mrb[0].mxu0 %v61
  %v180 = vpop.f32.mrb[0].mxu0
  %v181 = vadd.f32 %v48, %v180
  %v182 = vpop.f32.mrb[0].mxu0
  %183 = vmatprep.mubr.f32.mxu0 0.0
  %184 = vmatmul.mubr.f32.gmra.mrb[0].mxu0 %v64
  %v185 = vpop.f32.mrb[0].mxu0
  %v186 = vadd.f32 %v48, %v185
  %v187 = vpop.f32.mrb[0].mxu0
  %188 = vmatprep.mubr.f32.mxu0 0.0
  %189 = vmatmul.mubr.f32.gmra.mrb[0].mxu0 %v67
  %v190 = vpop.f32.mrb[0].mxu0
  %v191 = vadd.f32 %v48, %v190
  %v192 = vpop.f32.mrb[0].mxu0
  %193 = vmatprep.mubr.f32.mxu0 0.0
  %194 = vmatmul.mubr.f32.gmra.mrb[0].mxu0 %v70
  %v195 = vpop.f32.mrb[0].mxu0
  %v196 = vadd.f32 %v48, %v195
  %v197 = vpop.f32.mrb[0].mxu0
  %198 = vmatprep.mubr.f32.mxu0 0.0
  %199 = vmatmul.mubr.f32.gmra.mrb[0].mxu0 %v73
  %v200 = vpop.f32.mrb[0].mxu0
  %v201 = vadd.f32 %v48, %v200
  %v202 = vpop.f32.mrb[0].mxu0
  %203 = vmatprep.mubr.f32.mxu0 0.0
  %204 = vmatmul.mubr.f32.gmra.mrb[0].mxu0 %v76
  %v205 = vpop.f32.mrb[0].mxu0
  %v206 = vadd.f32 %v48, %v205
  %v207 = vpop.f32.mrb[0].mxu0
  %208 = vmatprep.mubr.f32.mxu0 0.0
  %209 = vmatmul.mubr.f32.gmra.mrb[0].mxu0 %v79
  %v210 = vpop.f32.mrb[0].mxu0
  %v211 = vadd.f32 %v48, %v210
  %v212 = vpop.f32.mrb[0].mxu0
  %213 = vmatprep.mubr.f32.mxu0 0.0
  %214 = vmatmul.mubr.f32.gmra.mrb[0].mxu0 %v82
  %v215 = vpop.f32.mrb[0].mxu0
  %v216 = vadd.f32 %v48, %v215
  %v217 = vpop.f32.mrb[0].mxu0
  %218 = vmatprep.mubr.f32.mxu0 0.0
  %219 = vmatmul.mubr.f32.gmra.mrb[0].mxu0 %v85
  %v220 = vpop.f32.mrb[0].mxu0
  %v221 = vadd.f32 %v48, %v220
  %v222 = vpop.f32.mrb[0].mxu0
  %223 = vmatprep.mubr.f32.mxu0 0.0
  %224 = vmatmul.mubr.f32.gmra.mrb[0].mxu0 %v88
  %v225 = vpop.f32.mrb[0].mxu0
  %v226 = vadd.f32 %v48, %v225
  %v227 = vpop.f32.mrb[0].mxu0
  %228 = vmatprep.mubr.f32.mxu0 0.0
  %229 = vmatmul.mubr.f32.gmra.mrb[0].mxu0 %v91
  %v230 = vpop.f32.mrb[0].mxu0
  %v231 = vadd.f32 %v48, %v230
  %v232 = vpop.f32.mrb[0].mxu0
  %233 = vmatprep.mubr.f32.mxu0 0.0
  %234 = vmatmul.mubr.f32.gmra.mrb[0].mxu0 %v94
  %v235 = vpop.f32.mrb[0].mxu0
  %v236 = vadd.f32 %v48, %v235
  %v237 = vpop.f32.mrb[0].mxu0
  %238 = vmatprep.mubr.f32.mxu0 0.0
  %239 = vmatmul.mubr.f32.gmra.mrb[0].mxu0 %v97
  %v240 = vpop.f32.mrb[0].mxu0
  %v241 = vadd.f32 %v48, %v240
  %v242 = vpop.f32.mrb[0].mxu0
  %243 = vdwg.mxu0
  %v244 = vsel %vm50, %v166, -inf
  %245 = vmax.xlane.f32.xlu0 %v244
  %v246 = vpop.xlane.xlu0 %245
  %v247 = vsel %vm50, %v171, -inf
  %248 = vmax.xlane.f32.xlu0 %v247
  %v249 = vpop.xlane.xlu0 %248
  %v250 = vsel %vm50, %v176, -inf
  %251 = vmax.xlane.f32.xlu0 %v250
  %v252 = vpop.xlane.xlu0 %251
  %v253 = vsel %vm50, %v181, -inf
  %254 = vmax.xlane.f32.xlu0 %v253
  %v255 = vpop.xlane.xlu0 %254
  %v256 = vsel %vm50, %v186, -inf
  %257 = vmax.xlane.f32.xlu0 %v256
  %v258 = vpop.xlane.xlu0 %257
  %v259 = vsel %vm50, %v191, -inf
  %260 = vmax.xlane.f32.xlu0 %v259
  %v261 = vpop.xlane.xlu0 %260
  %v262 = vsel %vm50, %v196, -inf
  %263 = vmax.xlane.f32.xlu0 %v262
  %v264 = vpop.xlane.xlu0 %263
  %v265 = vsel %vm50, %v201, -inf
  %266 = vmax.xlane.f32.xlu0 %v265
  %v267 = vpop.xlane.xlu0 %266
  %v268 = vsel %vm50, %v206, -inf
  %269 = vmax.xlane.f32.xlu0 %v268
  %v270 = vpop.xlane.xlu0 %269
  %v271 = vsel %vm50, %v211, -inf
  %272 = vmax.xlane.f32.xlu0 %v271
  %v273 = vpop.xlane.xlu0 %272
  %v274 = vsel %vm50, %v216, -inf
  %275 = vmax.xlane.f32.xlu0 %v274
  %v276 = vpop.xlane.xlu0 %275
  %v277 = vsel %vm50, %v221, -inf
  %278 = vmax.xlane.f32.xlu0 %v277
  %v279 = vpop.xlane.xlu0 %278
  %v280 = vsel %vm50, %v226, -inf
  %281 = vmax.xlane.f32.xlu0 %v280
  %v282 = vpop.xlane.xlu0 %281
  %v283 = vsel %vm50, %v231, -inf
  %284 = vmax.xlane.f32.xlu0 %v283
  %v285 = vpop.xlane.xlu0 %284
  %v286 = vsel %vm50, %v236, -inf
  %287 = vmax.xlane.f32.xlu0 %v286
  %v288 = vpop.xlane.xlu0 %287
  %v289 = vsel %vm50, %v241, -inf
  %290 = vmax.xlane.f32.xlu0 %v289
  %v291 = vpop.xlane.xlu0 %290
  %v292 = vsub.f32 %v166, %v246
  %v293 = vsub.f32 %v171, %v249
  %v294 = vsub.f32 %v176, %v252
  %v295 = vsub.f32 %v181, %v255
  %v296 = vsub.f32 %v186, %v258
  %v297 = vsub.f32 %v191, %v261
  %v298 = vsub.f32 %v196, %v264
  %v299 = vsub.f32 %v201, %v267
  %v300 = vsub.f32 %v206, %v270
  %v301 = vsub.f32 %v211, %v273
  %v302 = vsub.f32 %v216, %v276
  %v303 = vsub.f32 %v221, %v279
  %v304 = vsub.f32 %v226, %v282
  %v305 = vsub.f32 %v231, %v285
  %v306 = vsub.f32 %v236, %v288
  %v307 = vsub.f32 %v241, %v291
  %v308 = vmul.f32 %v292, 1.442695
  %v309 = vpow.pop %v308
  %v310 = vmul.f32 %v293, 1.442695
  %v311 = vpow.pop %v310
  %v312 = vmul.f32 %v294, 1.442695
  %v313 = vpow.pop %v312
  %v314 = vmul.f32 %v295, 1.442695
  %v315 = vpow.pop %v314
  %v316 = vmul.f32 %v296, 1.442695
  %v317 = vpow.pop %v316
  %v318 = vmul.f32 %v297, 1.442695
  %v319 = vpow.pop %v318
  %v320 = vmul.f32 %v298, 1.442695
  %v321 = vpow.pop %v320
  %v322 = vmul.f32 %v299, 1.442695
  %v323 = vpow.pop %v322
  %v324 = vmul.f32 %v300, 1.442695
  %v325 = vpow.pop %v324
  %v326 = vmul.f32 %v301, 1.442695
  %v327 = vpow.pop %v326
  %v328 = vmul.f32 %v302, 1.442695
  %v329 = vpow.pop %v328
  %v330 = vmul.f32 %v303, 1.442695
  %v331 = vpow.pop %v330
  %v332 = vmul.f32 %v304, 1.442695
  %v333 = vpow.pop %v332
  %v334 = vmul.f32 %v305, 1.442695
  %v335 = vpow.pop %v334
  %v336 = vmul.f32 %v306, 1.442695
  %v337 = vpow.pop %v336
  %v338 = vmul.f32 %v307, 1.442695
  %v339 = vpow.pop %v338
  %v340 = vld [vmem:[%s5] sm:$0xff]
  %v341 = vld [vmem:[%s5 + $0x8] sm:$0xff]
  %v342 = vld [vmem:[%s5 + $0x10] sm:$0xff]
  %v343 = vld [vmem:[%s5 + $0x18] sm:$0xff]
  %v345 = vsel %vm50, %v309, 0
  %v348 = vsel %vm50, %v311, 0
  %v351 = vsel %vm50, %v313, 0
  %v354 = vsel %vm50, %v315, 0
  %v357 = vsel %vm50, %v317, 0
  %v360 = vsel %vm50, %v319, 0
  %v363 = vsel %vm50, %v321, 0
  %v366 = vsel %vm50, %v323, 0
  %v369 = vsel %vm50, %v325, 0
  %v372 = vsel %vm50, %v327, 0
  %v375 = vsel %vm50, %v329, 0
  %v378 = vsel %vm50, %v331, 0
  %v381 = vsel %vm50, %v333, 0
  %v384 = vsel %vm50, %v335, 0
  %v387 = vsel %vm50, %v337, 0
  %v390 = vsel %vm50, %v339, 0
  %392 = vmatprep.subr.mxu0 0.0
  %393 = vmatpush1.msra.mxu0 %v340
  %394 = vmatprep.subr.mxu0 0.0
  %395 = vmatpush1.msra.mxu0 %v341
  %396 = vmatprep.subr.mxu0 0.0
  %397 = vmatpush1.msra.mxu0 %v342
  %398 = vmatprep.subr.mxu0 0.0
  %399 = vmatpush1.msra.mxu0 %v343
  %400 = vmatprep.subr.mxu0 0.0
  %401 = vmatpush1.msra.mxu0 0.0
  %402 = vmatprep.subr.mxu0 0.0
  %403 = vmatpush1.msra.mxu0 0.0
  %404 = vmatprep.subr.mxu0 0.0
  %405 = vmatpush1.msra.mxu0 0.0
  %406 = vmatprep.subr.mxu0 0.0
  %407 = vmatpush1.msra.mxu0 0.0
  %408 = vmatprep.subr.mxu0 0.0
  %409 = vmatpush1.msra.mxu0 0.0
  %410 = vmatprep.subr.mxu0 0.0
  %411 = vmatpush1.msra.mxu0 0.0
  %412 = vmatprep.subr.mxu0 0.0
  %413 = vmatpush1.msra.mxu0 0.0
  %414 = vmatprep.subr.mxu0 0.0
  %415 = vmatpush1.msra.mxu0 0.0
  %416 = vmatprep.subr.mxu0 0.0
  %417 = vmatpush1.msra.mxu0 0.0
  %418 = vmatprep.subr.mxu0 0.0
  %419 = vmatpush1.msra.mxu0 0.0
  %420 = vmatprep.subr.mxu0 0.0
  %421 = vmatpush1.msra.mxu0 0.0
  %422 = vmatprep.subr.mxu0 0.0
  %423 = vmatpush1.msra.mxu0 0.0
  %424 = vmatprep.subr.mxu0 0.0
  %425 = vmatpush1.msra.mxu0 0.0
  %426 = vmatprep.subr.mxu0 0.0
  %427 = vmatpush1.msra.mxu0 0.0
  %428 = vmatprep.subr.mxu0 0.0
  %429 = vmatpush1.msra.mxu0 0.0
  %430 = vmatprep.subr.mxu0 0.0
  %431 = vmatpush1.msra.mxu0 0.0
  %432 = vmatprep.subr.mxu0 0.0
  %433 = vmatpush1.msra.mxu0 0.0
  %434 = vmatprep.subr.mxu0 0.0
  %435 = vmatpush1.msra.mxu0 0.0
  %436 = vmatprep.subr.mxu0 0.0
  %437 = vmatpush1.msra.mxu0 0.0
  %438 = vmatprep.subr.mxu0 0.0
  %439 = vmatpush1.msra.mxu0 0.0
  %440 = vmatprep.subr.mxu0 0.0
  %441 = vmatpush1.msra.mxu0 0.0
  %442 = vmatprep.subr.mxu0 0.0
  %443 = vmatpush1.msra.mxu0 0.0
  %444 = vmatprep.subr.mxu0 0.0
  %445 = vmatpush1.msra.mxu0 0.0
  %446 = vmatprep.subr.mxu0 0.0
  %447 = vmatpush1.msra.mxu0 0.0
  %448 = vmatprep.subr.mxu0 0.0
  %449 = vmatpush1.msra.mxu0 0.0
  %450 = vmatprep.subr.mxu0 0.0
  %451 = vmatpush1.msra.mxu0 0.0
  %452 = vmatprep.subr.mxu0 0.0
  %453 = vmatpush1.msra.mxu0 0.0
  %454 = vmatprep.subr.mxu0 0.0
  %455 = vmatpush1.msra.mxu0 0.0
  %456 = vmatprep.mubr.f32.mxu0 0.0
  %457 = vmatmul.mubr.f32.gmra.mrb[0].mxu0 %v345
  %v458 = vpop.f32.mrb[0].mxu0
  %v459 = vadd.f32 0.0, %v458
  %v460 = vpop.f32.mrb[0].mxu0
  %461 = vmatprep.mubr.f32.mxu0 0.0
  %462 = vmatmul.mubr.f32.gmra.mrb[0].mxu0 %v348
  %v463 = vpop.f32.mrb[0].mxu0
  %v464 = vadd.f32 0.0, %v463
  %v465 = vpop.f32.mrb[0].mxu0
  %466 = vmatprep.mubr.f32.mxu0 0.0
  %467 = vmatmul.mubr.f32.gmra.mrb[0].mxu0 %v351
  %v468 = vpop.f32.mrb[0].mxu0
  %v469 = vadd.f32 0.0, %v468
  %v470 = vpop.f32.mrb[0].mxu0
  %471 = vmatprep.mubr.f32.mxu0 0.0
  %472 = vmatmul.mubr.f32.gmra.mrb[0].mxu0 %v354
  %v473 = vpop.f32.mrb[0].mxu0
  %v474 = vadd.f32 0.0, %v473
  %v475 = vpop.f32.mrb[0].mxu0
  %476 = vmatprep.mubr.f32.mxu0 0.0
  %477 = vmatmul.mubr.f32.gmra.mrb[0].mxu0 %v357
  %v478 = vpop.f32.mrb[0].mxu0
  %v479 = vadd.f32 0.0, %v478
  %v480 = vpop.f32.mrb[0].mxu0
  %481 = vmatprep.mubr.f32.mxu0 0.0
  %482 = vmatmul.mubr.f32.gmra.mrb[0].mxu0 %v360
  %v483 = vpop.f32.mrb[0].mxu0
  %v484 = vadd.f32 0.0, %v483
  %v485 = vpop.f32.mrb[0].mxu0
  %486 = vmatprep.mubr.f32.mxu0 0.0
  %487 = vmatmul.mubr.f32.gmra.mrb[0].mxu0 %v363
  %v488 = vpop.f32.mrb[0].mxu0
  %v489 = vadd.f32 0.0, %v488
  %v490 = vpop.f32.mrb[0].mxu0
  %491 = vmatprep.mubr.f32.mxu0 0.0
  %492 = vmatmul.mubr.f32.gmra.mrb[0].mxu0 %v366
  %v493 = vpop.f32.mrb[0].mxu0
  %v494 = vadd.f32 0.0, %v493
  %v495 = vpop.f32.mrb[0].mxu0
  %496 = vmatprep.mubr.f32.mxu0 0.0
  %497 = vmatmul.mubr.f32.gmra.mrb[0].mxu0 %v369
  %v498 = vpop.f32.mrb[0].mxu0
  %v499 = vadd.f32 0.0, %v498
  %v500 = vpop.f32.mrb[0].mxu0
  %501 = vmatprep.mubr.f32.mxu0 0.0
  %502 = vmatmul.mubr.f32.gmra.mrb[0].mxu0 %v372
  %v503 = vpop.f32.mrb[0].mxu0
  %v504 = vadd.f32 0.0, %v503
  %v505 = vpop.f32.mrb[0].mxu0
  %506 = vmatprep.mubr.f32.mxu0 0.0
  %507 = vmatmul.mubr.f32.gmra.mrb[0].mxu0 %v375
  %v508 = vpop.f32.mrb[0].mxu0
  %v509 = vadd.f32 0.0, %v508
  %v510 = vpop.f32.mrb[0].mxu0
  %511 = vmatprep.mubr.f32.mxu0 0.0
  %512 = vmatmul.mubr.f32.gmra.mrb[0].mxu0 %v378
  %v513 = vpop.f32.mrb[0].mxu0
  %v514 = vadd.f32 0.0, %v513
  %v515 = vpop.f32.mrb[0].mxu0
  %516 = vmatprep.mubr.f32.mxu0 0.0
  %517 = vmatmul.mubr.f32.gmra.mrb[0].mxu0 %v381
  %v518 = vpop.f32.mrb[0].mxu0
  %v519 = vadd.f32 0.0, %v518
  %v520 = vpop.f32.mrb[0].mxu0
  %521 = vmatprep.mubr.f32.mxu0 0.0
  %522 = vmatmul.mubr.f32.gmra.mrb[0].mxu0 %v384
  %v523 = vpop.f32.mrb[0].mxu0
  %v524 = vadd.f32 0.0, %v523
  %v525 = vpop.f32.mrb[0].mxu0
  %526 = vmatprep.mubr.f32.mxu0 0.0
  %527 = vmatmul.mubr.f32.gmra.mrb[0].mxu0 %v387
  %v528 = vpop.f32.mrb[0].mxu0
  %v529 = vadd.f32 0.0, %v528
  %v530 = vpop.f32.mrb[0].mxu0
  %531 = vmatprep.mubr.f32.mxu0 0.0
  %532 = vmatmul.mubr.f32.gmra.mrb[0].mxu0 %v390
  %v533 = vpop.f32.mrb[0].mxu0
  %v534 = vadd.f32 0.0, %v533
  %v535 = vpop.f32.mrb[0].mxu0
  %536 = vdwg.mxu0
  %v537 = vrcp.pop %v459
  %v538 = vrcp.pop %v464
  %v539 = vrcp.pop %v469
  %v540 = vrcp.pop %v474
  %v541 = vrcp.pop %v479
  %v542 = vrcp.pop %v484
  %v543 = vrcp.pop %v489
  %v544 = vrcp.pop %v494
  %v545 = vrcp.pop %v499
  %v546 = vrcp.pop %v504
  %v547 = vrcp.pop %v509
  %v548 = vrcp.pop %v514
  %v549 = vrcp.pop %v519
  %v550 = vrcp.pop %v524
  %v551 = vrcp.pop %v529
  %v552 = vrcp.pop %v534
  %v553 = vmul.f32 %v309, %v537
  %v554 = vmul.f32 %v311, %v538
  %v555 = vmul.f32 %v313, %v539
  %v556 = vmul.f32 %v315, %v540
  %v557 = vmul.f32 %v317, %v541
  %v558 = vmul.f32 %v319, %v542
  %v559 = vmul.f32 %v321, %v543
  %v560 = vmul.f32 %v323, %v544
  %v561 = vmul.f32 %v325, %v545
  %v562 = vmul.f32 %v327, %v546
  %v563 = vmul.f32 %v329, %v547
  %v564 = vmul.f32 %v331, %v548
  %v565 = vmul.f32 %v333, %v549
  %v566 = vmul.f32 %v335, %v550
  %v567 = vmul.f32 %v337, %v551
  %v568 = vmul.f32 %v339, %v552
  %585 = vrot.lane.b32.xlu0 %v166, 96
  %v586 = vpop.permute.xlu0 %585
  %587 = vrot.lane.b32.xlu0 %v171, 96
  %v588 = vpop.permute.xlu0 %587
  %589 = vrot.lane.b32.xlu0 %v176, 96
  %v590 = vpop.permute.xlu0 %589
  %591 = vrot.lane.b32.xlu0 %v181, 96
  %v592 = vpop.permute.xlu0 %591
  %593 = vrot.lane.b32.xlu0 %v186, 96
  %v594 = vpop.permute.xlu0 %593
  %595 = vrot.lane.b32.xlu0 %v191, 96
  %v596 = vpop.permute.xlu0 %595
  %597 = vrot.lane.b32.xlu0 %v196, 96
  %v598 = vpop.permute.xlu0 %597
  %599 = vrot.lane.b32.xlu0 %v201, 96
  %v600 = vpop.permute.xlu0 %599
  %601 = vrot.lane.b32.xlu0 %v206, 96
  %v602 = vpop.permute.xlu0 %601
  %603 = vrot.lane.b32.xlu0 %v211, 96
  %v604 = vpop.permute.xlu0 %603
  %605 = vrot.lane.b32.xlu0 %v216, 96
  %v606 = vpop.permute.xlu0 %605
  %607 = vrot.lane.b32.xlu0 %v221, 96
  %v608 = vpop.permute.xlu0 %607
  %609 = vrot.lane.b32.xlu0 %v226, 96
  %v610 = vpop.permute.xlu0 %609
  %611 = vrot.lane.b32.xlu0 %v231, 96
  %v612 = vpop.permute.xlu0 %611
  %613 = vrot.lane.b32.xlu0 %v236, 96
  %v614 = vpop.permute.xlu0 %613
  %615 = vrot.lane.b32.xlu0 %v241, 96
  %v616 = vpop.permute.xlu0 %615
  %v633 = vmul.f32 %v553, %v586
  %v634 = vmul.f32 %v554, %v588
  %v635 = vmul.f32 %v555, %v590
  %v636 = vmul.f32 %v556, %v592
  %v637 = vmul.f32 %v557, %v594
  %v638 = vmul.f32 %v558, %v596
  %v639 = vmul.f32 %v559, %v598
  %v640 = vmul.f32 %v560, %v600
  %v641 = vmul.f32 %v561, %v602
  %v642 = vmul.f32 %v562, %v604
  %v643 = vmul.f32 %v563, %v606
  %v644 = vmul.f32 %v564, %v608
  %v645 = vmul.f32 %v565, %v610
  %v646 = vmul.f32 %v566, %v612
  %v647 = vmul.f32 %v567, %v614
  %v648 = vmul.f32 %v568, %v616
  %v649 = vld [vmem:[%s3] sm:$0xff]
  %v650 = vld [vmem:[%s3 + $0x8] sm:$0xff]
  %v651 = vld [vmem:[%s3 + $0x10] sm:$0xff]
  %v652 = vld [vmem:[%s3 + $0x18] sm:$0xff]
  %v653 = vld [vmem:[%s4] sm:$0x1]
  %v655 = vlaneseq
  %v656 = vshrl.u32 %v655, 7
  %v657 = vsub.s32 0, %v656
  %v658 = vrot.slane %v653, %v657
  %v661 = vsel %vm50, %v633, 0
  %v664 = vsel %vm50, %v634, 0
  %v667 = vsel %vm50, %v635, 0
  %v670 = vsel %vm50, %v636, 0
  %v673 = vsel %vm50, %v637, 0
  %v676 = vsel %vm50, %v638, 0
  %v679 = vsel %vm50, %v639, 0
  %v682 = vsel %vm50, %v640, 0
  %v685 = vsel %vm50, %v641, 0
  %v688 = vsel %vm50, %v642, 0
  %v691 = vsel %vm50, %v643, 0
  %v694 = vsel %vm50, %v644, 0
  %v697 = vsel %vm50, %v645, 0
  %v700 = vsel %vm50, %v646, 0
  %v703 = vsel %vm50, %v647, 0
  %v706 = vsel %vm50, %v648, 0
  %708 = vmatprep.subr.mxu0 0.0
  %709 = vmatpush1.msra.mxu0 %v649
  %710 = vmatprep.subr.mxu0 0.0
  %711 = vmatpush1.msra.mxu0 %v650
  %712 = vmatprep.subr.mxu0 0.0
  %713 = vmatpush1.msra.mxu0 %v651
  %714 = vmatprep.subr.mxu0 0.0
  %715 = vmatpush1.msra.mxu0 %v652
  %716 = vmatprep.subr.mxu0 0.0
  %717 = vmatpush1.msra.mxu0 0.0
  %718 = vmatprep.subr.mxu0 0.0
  %719 = vmatpush1.msra.mxu0 0.0
  %720 = vmatprep.subr.mxu0 0.0
  %721 = vmatpush1.msra.mxu0 0.0
  %722 = vmatprep.subr.mxu0 0.0
  %723 = vmatpush1.msra.mxu0 0.0
  %724 = vmatprep.subr.mxu0 0.0
  %725 = vmatpush1.msra.mxu0 0.0
  %726 = vmatprep.subr.mxu0 0.0
  %727 = vmatpush1.msra.mxu0 0.0
  %728 = vmatprep.subr.mxu0 0.0
  %729 = vmatpush1.msra.mxu0 0.0
  %730 = vmatprep.subr.mxu0 0.0
  %731 = vmatpush1.msra.mxu0 0.0
  %732 = vmatprep.subr.mxu0 0.0
  %733 = vmatpush1.msra.mxu0 0.0
  %734 = vmatprep.subr.mxu0 0.0
  %735 = vmatpush1.msra.mxu0 0.0
  %736 = vmatprep.subr.mxu0 0.0
  %737 = vmatpush1.msra.mxu0 0.0
  %738 = vmatprep.subr.mxu0 0.0
  %739 = vmatpush1.msra.mxu0 0.0
  %740 = vmatprep.subr.mxu0 0.0
  %741 = vmatpush1.msra.mxu0 0.0
  %742 = vmatprep.subr.mxu0 0.0
  %743 = vmatpush1.msra.mxu0 0.0
  %744 = vmatprep.subr.mxu0 0.0
  %745 = vmatpush1.msra.mxu0 0.0
  %746 = vmatprep.subr.mxu0 0.0
  %747 = vmatpush1.msra.mxu0 0.0
  %748 = vmatprep.subr.mxu0 0.0
  %749 = vmatpush1.msra.mxu0 0.0
  %750 = vmatprep.subr.mxu0 0.0
  %751 = vmatpush1.msra.mxu0 0.0
  %752 = vmatprep.subr.mxu0 0.0
  %753 = vmatpush1.msra.mxu0 0.0
  %754 = vmatprep.subr.mxu0 0.0
  %755 = vmatpush1.msra.mxu0 0.0
  %756 = vmatprep.subr.mxu0 0.0
  %757 = vmatpush1.msra.mxu0 0.0
  %758 = vmatprep.subr.mxu0 0.0
  %759 = vmatpush1.msra.mxu0 0.0
  %760 = vmatprep.subr.mxu0 0.0
  %761 = vmatpush1.msra.mxu0 0.0
  %762 = vmatprep.subr.mxu0 0.0
  %763 = vmatpush1.msra.mxu0 0.0
  %764 = vmatprep.subr.mxu0 0.0
  %765 = vmatpush1.msra.mxu0 0.0
  %766 = vmatprep.subr.mxu0 0.0
  %767 = vmatpush1.msra.mxu0 0.0
  %768 = vmatprep.subr.mxu0 0.0
  %769 = vmatpush1.msra.mxu0 0.0
  %770 = vmatprep.subr.mxu0 0.0
  %771 = vmatpush1.msra.mxu0 0.0
  %772 = vmatprep.mubr.f32.mxu0 0.0
  %773 = vmatmul.mubr.f32.gmra.mrb[0].mxu0 %v661
  %v774 = vpop.f32.mrb[0].mxu0
  %v775 = vadd.f32 %v658, %v774
  %v776 = vpop.f32.mrb[0].mxu0
  %777 = vmatprep.mubr.f32.mxu0 0.0
  %778 = vmatmul.mubr.f32.gmra.mrb[0].mxu0 %v664
  %v779 = vpop.f32.mrb[0].mxu0
  %v780 = vadd.f32 %v658, %v779
  %v781 = vpop.f32.mrb[0].mxu0
  %782 = vmatprep.mubr.f32.mxu0 0.0
  %783 = vmatmul.mubr.f32.gmra.mrb[0].mxu0 %v667
  %v784 = vpop.f32.mrb[0].mxu0
  %v785 = vadd.f32 %v658, %v784
  %v786 = vpop.f32.mrb[0].mxu0
  %787 = vmatprep.mubr.f32.mxu0 0.0
  %788 = vmatmul.mubr.f32.gmra.mrb[0].mxu0 %v670
  %v789 = vpop.f32.mrb[0].mxu0
  %v790 = vadd.f32 %v658, %v789
  %v791 = vpop.f32.mrb[0].mxu0
  %792 = vmatprep.mubr.f32.mxu0 0.0
  %793 = vmatmul.mubr.f32.gmra.mrb[0].mxu0 %v673
  %v794 = vpop.f32.mrb[0].mxu0
  %v795 = vadd.f32 %v658, %v794
  %v796 = vpop.f32.mrb[0].mxu0
  %797 = vmatprep.mubr.f32.mxu0 0.0
  %798 = vmatmul.mubr.f32.gmra.mrb[0].mxu0 %v676
  %v799 = vpop.f32.mrb[0].mxu0
  %v800 = vadd.f32 %v658, %v799
  %v801 = vpop.f32.mrb[0].mxu0
  %802 = vmatprep.mubr.f32.mxu0 0.0
  %803 = vmatmul.mubr.f32.gmra.mrb[0].mxu0 %v679
  %v804 = vpop.f32.mrb[0].mxu0
  %v805 = vadd.f32 %v658, %v804
  %v806 = vpop.f32.mrb[0].mxu0
  %807 = vmatprep.mubr.f32.mxu0 0.0
  %808 = vmatmul.mubr.f32.gmra.mrb[0].mxu0 %v682
  %v809 = vpop.f32.mrb[0].mxu0
  %v810 = vadd.f32 %v658, %v809
  %v811 = vpop.f32.mrb[0].mxu0
  %812 = vmatprep.mubr.f32.mxu0 0.0
  %813 = vmatmul.mubr.f32.gmra.mrb[0].mxu0 %v685
  %v814 = vpop.f32.mrb[0].mxu0
  %v815 = vadd.f32 %v658, %v814
  %v816 = vpop.f32.mrb[0].mxu0
  %817 = vmatprep.mubr.f32.mxu0 0.0
  %818 = vmatmul.mubr.f32.gmra.mrb[0].mxu0 %v688
  %v819 = vpop.f32.mrb[0].mxu0
  %v820 = vadd.f32 %v658, %v819
  %v821 = vpop.f32.mrb[0].mxu0
  %822 = vmatprep.mubr.f32.mxu0 0.0
  %823 = vmatmul.mubr.f32.gmra.mrb[0].mxu0 %v691
  %v824 = vpop.f32.mrb[0].mxu0
  %v825 = vadd.f32 %v658, %v824
  %v826 = vpop.f32.mrb[0].mxu0
  %827 = vmatprep.mubr.f32.mxu0 0.0
  %828 = vmatmul.mubr.f32.gmra.mrb[0].mxu0 %v694
  %v829 = vpop.f32.mrb[0].mxu0
  %v830 = vadd.f32 %v658, %v829
  %v831 = vpop.f32.mrb[0].mxu0
  %832 = vmatprep.mubr.f32.mxu0 0.0
  %833 = vmatmul.mubr.f32.gmra.mrb[0].mxu0 %v697
  %v834 = vpop.f32.mrb[0].mxu0
  %v835 = vadd.f32 %v658, %v834
  %v836 = vpop.f32.mrb[0].mxu0
  %837 = vmatprep.mubr.f32.mxu0 0.0
  %838 = vmatmul.mubr.f32.gmra.mrb[0].mxu0 %v700
  %v839 = vpop.f32.mrb[0].mxu0
  %v840 = vadd.f32 %v658, %v839
  %v841 = vpop.f32.mrb[0].mxu0
  %842 = vmatprep.mubr.f32.mxu0 0.0
  %843 = vmatmul.mubr.f32.gmra.mrb[0].mxu0 %v703
  %v844 = vpop.f32.mrb[0].mxu0
  %v845 = vadd.f32 %v658, %v844
  %v846 = vpop.f32.mrb[0].mxu0
  %847 = vmatprep.mubr.f32.mxu0 0.0
  %848 = vmatmul.mubr.f32.gmra.mrb[0].mxu0 %v706
  %v849 = vpop.f32.mrb[0].mxu0
  %v850 = vadd.f32 %v658, %v849
  %v851 = vpop.f32.mrb[0].mxu0
  %852 = vdwg.mxu0
  %v853 = vadd.f32 %v23, %v775
  %v854 = vadd.f32 %v24, %v780
  %v855 = vadd.f32 %v25, %v785
  %v856 = vadd.f32 %v26, %v790
  %v857 = vadd.f32 %v27, %v795
  %v858 = vadd.f32 %v28, %v800
  %v859 = vadd.f32 %v29, %v805
  %v860 = vadd.f32 %v30, %v810
  %v861 = vadd.f32 %v31, %v815
  %v862 = vadd.f32 %v32, %v820
  %v863 = vadd.f32 %v33, %v825
  %v864 = vadd.f32 %v34, %v830
  %v865 = vadd.f32 %v35, %v835
  %v866 = vadd.f32 %v36, %v840
  %v867 = vadd.f32 %v37, %v845
  %v868 = vadd.f32 %v38, %v850
  %869 = vst.msk [vmem:[%s6] sm:$0xff] %vm50, %v853
  %870 = vst.msk [vmem:[%s6 + $0x8] sm:$0xff] %vm50, %v854
  %871 = vst.msk [vmem:[%s6 + $0x10] sm:$0xff] %vm50, %v855
  %872 = vst.msk [vmem:[%s6 + $0x18] sm:$0xff] %vm50, %v856
  %873 = vst.msk [vmem:[%s6 + $0x20] sm:$0xff] %vm50, %v857
  %874 = vst.msk [vmem:[%s6 + $0x28] sm:$0xff] %vm50, %v858
  %875 = vst.msk [vmem:[%s6 + $0x30] sm:$0xff] %vm50, %v859
  %876 = vst.msk [vmem:[%s6 + $0x38] sm:$0xff] %vm50, %v860
  %877 = vst.msk [vmem:[%s6 + $0x40] sm:$0xff] %vm50, %v861
  %878 = vst.msk [vmem:[%s6 + $0x48] sm:$0xff] %vm50, %v862
  %879 = vst.msk [vmem:[%s6 + $0x50] sm:$0xff] %vm50, %v863
  %880 = vst.msk [vmem:[%s6 + $0x58] sm:$0xff] %vm50, %v864
  %881 = vst.msk [vmem:[%s6 + $0x60] sm:$0xff] %vm50, %v865
  %882 = vst.msk [vmem:[%s6 + $0x68] sm:$0xff] %vm50, %v866
  %883 = vst.msk [vmem:[%s6 + $0x70] sm:$0xff] %vm50, %v867
  %884 = vst.msk [vmem:[%s6 + $0x78] sm:$0xff] %vm50, %v868
  // Predicated region
  $region26: #{cont_forward.1} parent=0 // pred_check
    _
  $region27: #{cont_forward.1} parent=0 // pred_check_branch
    %886 = sbr.rel (0) target = $region29
  $region28: #{cont_forward.1} parent=0 // pred_region
    _
  $region29: #{cont_forward.1} parent=0 // pred_fallthru
    _
  // Predicated region
  $region30: #{cont_forward.1} parent=0 // pred_check
    _
  $region31: #{cont_forward.1} parent=0 // pred_check_branch
    %888 = sbr.rel (0) target = $region33
  $region32: #{cont_forward.1} parent=0 // pred_region
    _
  $region33: #{cont_forward.1} parent=0 // pred_fallthru
    _

</llo_original>
